<compile_context>
chip_gen: v6e
topology: v6e:2x2x1
jax: 0.10.0
libtpu: 0.0.40
codegen_flags: <defaults>
</compile_context>

<pallas_src>
import jax
import jax.numpy as jnp
from jax.experimental import pallas as pl
from jax.experimental.pallas import tpu as pltpu

_LANES = (512, 256, 128)                 # candidate lane-dense last dims
_TARGET_TILE_BYTES = 2 * 1024 * 1024     # per-buffer tile target (safe on v5e/v6e/v7x)


# ----------------------------- Pallas kernel --------------------------------

def _grl_bwd_kernel(alpha_ref, g_ref, o_ref):
    # Keep the body minimal: one vmul per streamed vreg — the kernel is
    # DMA/HBM-bound on all generations, so compute slots have huge slack.
    scale = (-alpha_ref[0]).astype(g_ref.dtype)
    o_ref[...] = (g_ref[...] * scale).astype(o_ref.dtype)


# ------------------------------ helpers --------------------------------------

def _round_up(x, m):
    return ((x + m - 1) // m) * m


def _choose_layout(total, itemsize):
    """Pick a lane-dense (rows, lane) layout that needs no padding.

    Returns (lane, rows) or (None, None) if no aligned layout exists.
    """
    # Preferred: widest lane whose row count tiles cleanly by 8 sublanes.
    for lane in _LANES:
        if total % lane == 0 and (total // lane) % 8 == 0:
            return lane, total // lane
    # Small arrays: a single full block (block_shape == array shape is legal
    # even when rows % 8 != 0), as long as it comfortably fits one VMEM buffer.
    for lane in _LANES:
        if total % lane == 0 and total * itemsize <= _TARGET_TILE_BYTES:
            return lane, total // lane
    return None, None


# ------------------------------ wrapper --------------------------------------

def _neg_scale_pallas(g, alpha):
    """Compute -alpha * g; Pallas kernel on aligned sizes, fused jnp otherwise."""
    orig_shape = g.shape
    orig_dtype = g.dtype
    total = g.size
    if total == 0:
        return g

    itemsize = jnp.dtype(orig_dtype).itemsize
    lane, rows = _choose_layout(total, itemsize)

    if lane is None:
        # Ragged size: no pad/slice round-trips — let XLA fuse the scale.
        return (g * jnp.asarray(-alpha, dtype=orig_dtype)).reshape(orig_shape)

    g2d = g.reshape(rows, lane)  # pure relayout of a contiguous array (no copy)

    # Tile rows: <= _TARGET_TILE_BYTES per buffer, multiple of 8, and aim for
    # >= 4 grid steps so both v7x TensorCores stream with double buffering.
    max_tm = max(8, (_TARGET_TILE_BYTES // (lane * itemsize)) // 8 * 8)
    if rows % 8 == 0:
        tm = max(8, min(rows, max_tm, _round_up(pl.cdiv(rows, 4), 8)))
    else:
        tm = rows  # only small arrays reach here — single full block
    grid = (pl.cdiv(rows, tm),)

    alpha_arr = jnp.asarray([alpha], dtype=jnp.float32)

    out2d = pl.pallas_call(
        _grl_bwd_kernel,
        out_shape=jax.ShapeDtypeStruct((rows, lane), orig_dtype),
        grid=grid,
        in_specs=[
            pl.BlockSpec(memory_space=pltpu.MemorySpace.SMEM),  # alpha scalar
            pl.BlockSpec((tm, lane), lambda i: (i, 0)),         # gradient tile
        ],
        out_specs=pl.BlockSpec((tm, lane), lambda i: (i, 0)),
        compiler_params=pltpu.CompilerParams(
            dimension_semantics=("parallel",),
        ),
    )(alpha_arr, g2d)

    return out2d.reshape(orig_shape)


class GradientReversalLayer:
    """JAX/Pallas equivalent of the PyTorch GradientReversalLayer."""

    def __init__(self, alpha=1.0):
        self.alpha = float(alpha)

        @jax.custom_vjp
        def grl(x):
            return x  # forward is the identity — no copy, no HBM traffic

        def grl_fwd(x):
            return x, None

        def grl_bwd(_, g):
            return (_neg_scale_pallas(g, self.alpha),)

        grl.defvjp(grl_fwd, grl_bwd)
        self._grl = grl

    def __call__(self, x):
        return self._grl(x)


# ------------------------------- demo / test ---------------------------------

if __name__ == "__main__":
    key = jax.random.PRNGKey(0)
    # Small NCHW input, consistent with a conv-feature-map style use of GRL.
    x = jax.random.normal(key, (2, 4, 16, 16), dtype=jnp.float32)

    layer = GradientReversalLayer(alpha=0.75)

    # Forward pass: pure identity (same values, shape, dtype).
    y = jax.block_until_ready(layer(x))
    assert y.shape == x.shape and y.dtype == x.dtype
    assert bool(jnp.allclose(y, x)), "forward must be identity"

    # Backward check 1 (aligned fast path, 2048 elems -> (8, 256) slab):
    # grad of sum(layer(x)) is -alpha everywhere.
    gx = jax.block_until_ready(jax.grad(lambda z: jnp.sum(layer(z)))(x))
    assert bool(jnp.allclose(gx, -layer.alpha * jnp.ones_like(x), atol=1e-6)), \
        "backward must be -alpha * grad_output"

    # Backward check 2: non-trivial upstream gradient, grad of sum(layer(x)**2)
    # through the reversal is -alpha * 2 * x.
    gx2 = jax.block_until_ready(jax.grad(lambda z: jnp.sum(layer(z) ** 2))(x))
    assert bool(jnp.allclose(gx2, -layer.alpha * 2.0 * x, atol=1e-5)), \
        "backward must reverse and scale arbitrary upstream gradients"

    # Backward check 3: ragged size (105 elems) exercises the fused-jnp fallback.
    xr = jax.random.normal(jax.random.PRNGKey(0), (3, 5, 7), dtype=jnp.float32)
    gxr = jax.block_until_ready(jax.grad(lambda z: jnp.sum(layer(z)))(xr))
    assert bool(jnp.allclose(gxr, -layer.alpha * jnp.ones_like(xr), atol=1e-6)), \
        "ragged fallback must also return -alpha * grad_output"

    print("KERNEL_OK")
</pallas_src>

<mosaic_0001>
module attributes {stable_mosaic.version = 11 : i64} {
  func.func @_grl_bwd_kernel(%arg0: i32, %arg1: memref<1xf32, #tpu.memory_space<smem>>, %arg2: memref<8x256xf32, #tpu.memory_space<vmem>>, %arg3: memref<8x256xf32, #tpu.memory_space<vmem>>) attributes {dimension_semantics = [#tpu.dimension_semantics<parallel>], iteration_bounds = array<i64: 1>, scalar_prefetch = 0 : i64, scratch_operands = 0 : i64, tpu.core_type = #tpu.core_type<tc>, window_params = [{transform_indices = @transform_0, window_bounds = array<i64: 1>}, {transform_indices = @transform_1, window_bounds = array<i64: 8, 256>}, {transform_indices = @transform_2, window_bounds = array<i64: 8, 256>}]} {
    %c0 = arith.constant 0 : index
    %0 = memref.load %arg1[%c0] : memref<1xf32, #tpu.memory_space<smem>>
    %cst = arith.constant 0.000000e+00 : f32
    %1 = arith.subf %cst, %0 : f32
    %c0_0 = arith.constant 0 : index
    %c0_1 = arith.constant 0 : index
    %2 = vector.load %arg2[%c0_0, %c0_1] : memref<8x256xf32, #tpu.memory_space<vmem>>, vector<8x256xf32>
    %3 = vector.broadcast %1 : f32 to vector<8x256xf32>
    %4 = arith.mulf %2, %3 : vector<8x256xf32>
    %c0_2 = arith.constant 0 : index
    %c0_3 = arith.constant 0 : index
    %5 = vector.load %arg3[%c0_2, %c0_3] : memref<8x256xf32, #tpu.memory_space<vmem>>, vector<8x256xf32>
    tpu.vector_store %arg3[%c0_2, %c0_3], %4 {strides = array<i32>} : memref<8x256xf32, #tpu.memory_space<vmem>>, vector<8x256xf32>,
    return
  }
  func.func @transform_0(%arg0: i32) -> i32 {
    %c0_i32 = arith.constant 0 : i32
    %c0_i32_0 = arith.constant 0 : i32
    return %c0_i32 : i32
  }
  func.func @transform_1(%arg0: i32) -> (i32, i32) {
    %c0_i32 = arith.constant 0 : i32
    %c0_i32_0 = arith.constant 0 : i32
    return %arg0, %c0_i32 : i32, i32
  }
  func.func @transform_2(%arg0: i32) -> (i32, i32) {
    %c0_i32 = arith.constant 0 : i32
    %c0_i32_0 = arith.constant 0 : i32
    return %arg0, %c0_i32 : i32, i32
  }
}

</mosaic_0001>

<llo_original>
// kernel: tpu_custom_call.1
$region0: #{tpu_custom_call.1}
  #allocation0 [shape = 'u32[]', space=smem, size = 0x4, offset = 0x4, fixed_abs, tag = 'smem constant byte address 0x4 - core index']
  #allocation1 [shape = 'u32[144,128]{1,0:T(1,128)}', space=vmem, size = 0x12000, scoped, tag = 'internal scratch']
  #allocation2 [shape = 'f32[1]{0:T(128)S(6)}', space=smem, size = 0x200, scoped, tag = 'scoped memory for tpu_custom_call.1']
  %s0 = inlined_call_operand.<no memory space> [shape: f32[1], index: 0, kind: input, shape index: {}]
  %s1 = inlined_call_operand.hbm [shape: f32[8,256], index: 1, kind: input, shape index: {}]
  %s2 = inlined_call_operand.hbm [shape: f32[8,256], index: 2, kind: output, shape index: {}]
  %s3 = sld [smem:[#allocation0]]
  $region22: #{tpu_custom_call.1} parent=0
    _
  %s5 = ssub.s32 1, %s3
  %s6 = scalar_select 0, %s5, %s3
  %7 = sst [smem:[#allocation2]] %s0
  $region1: #{tpu_custom_call.1} parent=0
    #allocation3 [shape = 'u8[8192]{0}', space=vmem, size = 0x2000, scoped, tag = 'input window, operand 1, single buffered']
    #allocation4 [shape = 's32[1]{0}', space=sflag, size = 0x4, scoped, tag = 'scoped memory for tpu_custom_call.1']
    #allocation5 [shape = 's32[1]{0}', space=sflag, size = 0x4, scoped, tag = 'scoped memory for tpu_custom_call.1']
    #allocation6 [shape = 'u8[8192]{0}', space=vmem, size = 0x2000, scoped, tag = 'output window, operand 0, single buffered']
    %8 = vsyncpa [#allocation4], 0
    %9 = vsyncpa [#allocation5], 0
    // Predicated region
    $region2: #{tpu_custom_call.1} parent=1 // pred_check
      _
    $region3: #{tpu_custom_call.1} parent=1 // pred_check_branch
      %11 = sbr.rel (0) target = $region5
    $region4: #{tpu_custom_call.1} parent=1 // pred_region
      _
    $region5: #{tpu_custom_call.1} parent=1 // pred_fallthru
      _
    // Predicated region
    $region6: #{tpu_custom_call.1} parent=1 // pred_check
      _
    $region7: #{tpu_custom_call.1} parent=1 // pred_check_branch
      %13 = sbr.rel (0) target = $region9
    $region8: #{tpu_custom_call.1} parent=1 // pred_region
      %s15 = ssub.s32 256, 256
      %16 = vsyncadd [#allocation4], %s15
      %s18 = sshll.u32 [#allocation3], 4
      %s19 = int_to_ptr.vmem [resolvable:$true] %s18
      %21 = dma.hbm_to_vmem [thread:$0]  %s1, 256, %s19, [#allocation4]
    $region9: #{tpu_custom_call.1} parent=1 // pred_fallthru
      _
    // Predicated region
    $region10: #{tpu_custom_call.1} parent=1 // pred_check
      _
    $region11: #{tpu_custom_call.1} parent=1 // pred_check_branch
      %23 = sbr.rel (0) target = $region13
    $region12: #{tpu_custom_call.1} parent=1 // pred_region
      %24 = dma.done [#allocation4], 256
    $region13: #{tpu_custom_call.1} parent=1 // pred_fallthru
      _
    %s25 = sld [smem:[#allocation2]]
    %s26 = ssub.f32 0.0, %s25
    %v27 = vld [vmem:[#allocation3] sm:$0xff]
    %v28 = vld [vmem:[#allocation3 + $0x8] sm:$0xff]
    %v29 = vstv %s26
    %v30 = vmul.f32 %v27, %v29
    %v31 = vmul.f32 %v28, %v29
    %32 = vst [vmem:[#allocation6] sm:$0xff] %v30
    %33 = vst [vmem:[#allocation6 + $0x8] sm:$0xff] %v31
    // Predicated region
    $region14: #{tpu_custom_call.1} parent=1 // pred_check
      _
    $region15: #{tpu_custom_call.1} parent=1 // pred_check_branch
      %35 = sbr.rel (0) target = $region17
    $region16: #{tpu_custom_call.1} parent=1 // pred_region
      %s37 = ssub.s32 256, 256
      %38 = vsyncadd [#allocation5], %s37
      %s40 = sshll.u32 [#allocation6], 4
      %s41 = int_to_ptr.vmem [resolvable:$true] %s40
      %43 = dma.vmem_to_hbm [thread:$0]  %s41, 256, %s2, [#allocation5]
    $region17: #{tpu_custom_call.1} parent=1 // pred_fallthru
      _
    // Predicated region
    $region18: #{tpu_custom_call.1} parent=1 // pred_check
      _
    $region19: #{tpu_custom_call.1} parent=1 // pred_check_branch
      %45 = sbr.rel (0) target = $region21
    $region20: #{tpu_custom_call.1} parent=1 // pred_region
      %46 = dma.done [#allocation5], 256
    $region21: #{tpu_custom_call.1} parent=1 // pred_fallthru
      _
    %47 = vsyncpa [#allocation4], 1
    %48 = vsyncpa [#allocation5], 1

</llo_original>
